<compile_context>
chip_gen: v5e
topology: v5e:2x2
jax: 0.10.0
libtpu: 0.0.40
codegen_flags: <defaults>
</compile_context>

<pallas_src>
import jax
import jax.numpy as jnp
from jax import lax
from jax.experimental import pallas as pl
from jax.experimental.pallas import tpu as pltpu


def _gnn_pe_kernel(x_ref, adj_ref, w1a_ref, w1b_ref, w2_ref, out_ref):
    # x_ref/adj_ref: (Bt, n, n) compute_dtype; w1a/w1b: (n, H_p); w2: (H_p, ninp)
    # out_ref: (Bt*n, ninp) out_dtype
    Bt, n, _ = x_ref.shape
    H = w1a_ref.shape[1]

    x = x_ref[...]                                    # (Bt, n, n)
    x2 = x.reshape(Bt * n, n)                         # stack graphs: MXU M = Bt*n

    # First concat half:  x @ W1[:max_n]              (M=Bt*n, K=n, N=H_p)
    h = jnp.dot(x2, w1a_ref[...], preferred_element_type=jnp.float32)

    # Second half, reassociated:  adj^T @ (x @ W1[max_n:]).
    #   t has a lane-dense (., H_p) layout; the batched contraction over dim 1
    #   of both operands consumes adj in place (no XLU transpose) and runs in
    #   f32 so the integer-valued adjacency sums never round.
    t = jnp.dot(x2, w1b_ref[...], preferred_element_type=jnp.float32)
    t = t.reshape(Bt, n, H)
    hb = lax.dot_general(
        adj_ref[...].astype(jnp.float32), t,
        dimension_numbers=(((1,), (1,)), ((0,), (0,))),
        preferred_element_type=jnp.float32)           # (Bt, n, H_p)

    h = jnp.maximum(h + hb.reshape(Bt * n, H), 0.0)   # ReLU (VPU), f32 accum

    out = jnp.dot(h.astype(w2_ref.dtype), w2_ref[...],
                  preferred_element_type=jnp.float32)  # (Bt*n, ninp)
    out_ref[...] = out.astype(out_ref.dtype)


def _round_up(v, m):
    return (v + m - 1) // m * m


def _sublane(dtype):
    # Sublane multiple for a packed dtype: 8 for f32, 16 for bf16, 32 for int8.
    return 8 * max(1, 4 // jnp.dtype(dtype).itemsize)


def _tiled_bytes(shape, dtype):
    # VMEM footprint of a buffer after (sublane, 128-lane) tiling.
    itemsize = jnp.dtype(dtype).itemsize
    dims = list(shape)
    dims[-1] = _round_up(dims[-1], 128)
    if len(dims) >= 2:
        dims[-2] = _round_up(dims[-2], _sublane(dtype))
    n = itemsize
    for d in dims:
        n *= d
    return n


def prepare_pace_weights(W1, W2, max_n, *, compute_dtype=jnp.bfloat16):
    """Pad/cast the weights once (hoist out of the per-call path for inference).

    Returns (w1a, w1b, w2p) with zero padding; re-run after any weight update so
    the padded rows/cols stay exactly zero.
    """
    hdim, ninp = W2.shape
    assert W1.shape == (2 * max_n, hdim)
    cd = jnp.dtype(compute_dtype)
    n_p = _round_up(max_n, _sublane(cd))
    H_p = _round_up(hdim, 128)
    w1a = jnp.zeros((n_p, H_p), cd).at[:max_n, :hdim].set(W1[:max_n].astype(cd))
    w1b = jnp.zeros((n_p, H_p), cd).at[:max_n, :hdim].set(W1[max_n:].astype(cd))
    w2p = jnp.zeros((H_p, ninp), cd).at[:hdim, :].set(W2.astype(cd))
    return (w1a, w1b, w2p)


def gnn_positional_encoding(x, adj, W1=None, W2=None, *, prepared_weights=None,
                            compute_dtype=jnp.bfloat16, out_dtype=None):
    """Forward pass. x, adj: (B, max_n, max_n); W1: (2*max_n, 2*ninp); W2: (2*ninp, ninp).

    compute_dtype: MXU input dtype (bf16 default; x/adj are 0/1 so only weights
    lose precision).  Accumulation is always float32.  out_dtype defaults to
    compute_dtype (override to float32 for bit-exact checks).
    """
    B, max_n, _ = x.shape
    if prepared_weights is None:
        prepared_weights = prepare_pace_weights(W1, W2, max_n,
                                                compute_dtype=compute_dtype)
    w1a, w1b, w2p = prepared_weights
    cd = w1a.dtype
    n_p, H_p = w1a.shape
    ninp = w2p.shape[1]
    assert w1b.shape == (n_p, H_p) and w2p.shape == (H_p, ninp) and n_p >= max_n
    od = jnp.dtype(out_dtype) if out_dtype is not None else jnp.dtype(cd)

    # --- Batch tiling: Bt graphs per grid step so matmul M = Bt*n_p -----------
    VMEM_BUDGET = 16 * 1024 * 1024          # conservative across v5e/v6e/v7x

    def _footprint(bt):
        rows = bt * n_p
        fp = 2 * 2 * _tiled_bytes((bt, n_p, n_p), cd)           # x, adj (dbl-buf)
        fp += 2 * _tiled_bytes((rows, ninp), od)                 # output (dbl-buf)
        fp += 2 * (2 * _tiled_bytes((n_p, H_p), cd)              # weights (dbl-buf)
                   + _tiled_bytes((H_p, ninp), cd))
        fp += (_tiled_bytes((bt, n_p, n_p), jnp.float32)         # adj in f32
               + 3 * _tiled_bytes((rows, H_p), jnp.float32)      # h, t, hb
               + _tiled_bytes((rows, H_p), cd)                   # h cast for W2
               + _tiled_bytes((rows, ninp), jnp.float32))        # out accumulator
        return fp

    Bt = max(1, 512 // n_p)              # ~512-row MXU M target (don't raise: v5e)
    Bt = min(Bt, max(1, B // 4))         # keep >= ~4 grid steps (v7x has 2 TCs)
    while Bt > 1 and _footprint(Bt) > VMEM_BUDGET:
        Bt //= 2
    Bt = max(1, min(Bt, B))
    B_p = _round_up(B, Bt)

    # --- Pad/cast inputs only when needed (zero rows/cols are inert end-to-end)
    def _prep(a):
        if a.shape == (B_p, n_p, n_p) and a.dtype == cd:
            return a
        if a.shape == (B_p, n_p, n_p):
            return a.astype(cd)
        buf = jnp.zeros((B_p, n_p, n_p), cd)
        return buf.at[:B, :max_n, :max_n].set(a.astype(cd))

    xp, adjp = _prep(x), _prep(adj)

    out2d = pl.pallas_call(
        _gnn_pe_kernel,
        out_shape=jax.ShapeDtypeStruct((B_p * n_p, ninp), od),
        grid_spec=pltpu.PrefetchScalarGridSpec(
            num_scalar_prefetch=0,
            grid=(B_p // Bt,),
            in_specs=[
                pl.BlockSpec((Bt, n_p, n_p), lambda b: (b, 0, 0)),   # x
                pl.BlockSpec((Bt, n_p, n_p), lambda b: (b, 0, 0)),   # adj
                pl.BlockSpec((n_p, H_p), lambda b: (0, 0)),          # W1[:max_n]
                pl.BlockSpec((n_p, H_p), lambda b: (0, 0)),          # W1[max_n:]
                pl.BlockSpec((H_p, ninp), lambda b: (0, 0)),         # W2
            ],
            out_specs=pl.BlockSpec((Bt * n_p, ninp), lambda b: (b, 0)),
        ),
        compiler_params=pltpu.CompilerParams(
            dimension_semantics=("parallel",),
            vmem_limit_bytes=32 * 1024 * 1024),
    )(xp, adjp, w1a, w1b, w2p)

    out = out2d.reshape(B_p, n_p, ninp)
    if B_p == B and n_p == max_n:
        return out
    return out[:B, :max_n, :]


def _xavier_uniform(key, shape, gain=1.414):
    fan_out, fan_in = shape  # PyTorch: dim0 = fan_out, dim1 = fan_in for 2D params
    bound = gain * (6.0 / (fan_in + fan_out)) ** 0.5
    return jax.random.uniform(key, shape, jnp.float32, minval=-bound, maxval=bound)


def _reference(x, adj, W1, W2):
    pos = jnp.concatenate([x, jnp.einsum('bkm,bkn->bmn', adj, x)], axis=2)
    pos = jax.nn.relu(pos @ W1)
    return pos @ W2


if __name__ == "__main__":
    # Small, module-consistent shapes: batch=2, max_n=16, ninp=32, dropout=0.0
    B, MAX_N, NINP = 2, 16, 32

    key = jax.random.PRNGKey(0)
    k_x, k_adj, k_w1, k_w2 = jax.random.split(key, 4)

    # x: rows of a one-hot position matrix (nodes past the end are all-zero rows)
    x = jnp.zeros((B, MAX_N, MAX_N), jnp.float32)
    for b in range(B):
        n_nodes = MAX_N - 2 * b
        x = x.at[b, jnp.arange(n_nodes), jnp.arange(n_nodes)].set(1.0)

    # adj: dense 0/1 adjacency matrix
    adj = (jax.random.uniform(k_adj, (B, MAX_N, MAX_N)) > 0.7).astype(jnp.float32)

    # Deterministic xavier_uniform(gain=1.414) parameter init
    W1 = _xavier_uniform(k_w1, (2 * MAX_N, 2 * NINP))
    W2 = _xavier_uniform(k_w2, (2 * NINP, NINP))

    ref = _reference(x, adj, W1, W2)

    # Exact-parity check: float32 compute + float32 output must match the reference.
    out_f32 = jax.block_until_ready(
        gnn_positional_encoding(x, adj, W1, W2, compute_dtype=jnp.float32))
    assert out_f32.shape == (B, MAX_N, NINP), out_f32.shape
    assert out_f32.dtype == jnp.float32
    assert jnp.allclose(out_f32, ref, atol=1e-4, rtol=1e-4), \
        float(jnp.max(jnp.abs(out_f32 - ref)))

    # Default path: bf16 MXU inputs, bf16 output, f32 accumulation, weights
    # pre-padded once (hoisted out of the hot path).
    prep = prepare_pace_weights(W1, W2, MAX_N, compute_dtype=jnp.bfloat16)
    out_bf16 = jax.block_until_ready(
        gnn_positional_encoding(x, adj, prepared_weights=prep))
    assert out_bf16.shape == (B, MAX_N, NINP), out_bf16.shape
    out_bf16_f32 = out_bf16.astype(jnp.float32)
    assert jnp.allclose(out_bf16_f32, ref, atol=5e-2, rtol=5e-2), \
        float(jnp.max(jnp.abs(out_bf16_f32 - ref)))

    print("KERNEL_OK")
</pallas_src>

<mosaic_0001>
module attributes {stable_mosaic.version = 11 : i64} {
  func.func @_gnn_pe_kernel(%arg0: i32, %arg1: memref<1x16x16xf32, #tpu.memory_space<vmem>>, %arg2: memref<1x16x16xf32, #tpu.memory_space<vmem>>, %arg3: memref<16x128xf32, #tpu.memory_space<vmem>>, %arg4: memref<16x128xf32, #tpu.memory_space<vmem>>, %arg5: memref<128x32xf32, #tpu.memory_space<vmem>>, %arg6: memref<16x32xf32, #tpu.memory_space<vmem>>) attributes {dimension_semantics = [#tpu.dimension_semantics<parallel>], iteration_bounds = array<i64: 2>, scalar_prefetch = 0 : i64, scratch_operands = 0 : i64, tpu.core_type = #tpu.core_type<tc>, window_params = [{transform_indices = @transform_0, window_bounds = array<i64: 1, 16, 16>}, {transform_indices = @transform_1, window_bounds = array<i64: 1, 16, 16>}, {pipeline_mode = #tpu.pipeline_mode<synchronous>, transform_indices = @transform_2, window_bounds = array<i64: 16, 128>}, {pipeline_mode = #tpu.pipeline_mode<synchronous>, transform_indices = @transform_3, window_bounds = array<i64: 16, 128>}, {pipeline_mode = #tpu.pipeline_mode<synchronous>, transform_indices = @transform_4, window_bounds = array<i64: 128, 32>}, {transform_indices = @transform_5, window_bounds = array<i64: 16, 32>}]} {
    %c0 = arith.constant 0 : index
    %c0_0 = arith.constant 0 : index
    %c0_1 = arith.constant 0 : index
    %0 = vector.load %arg1[%c0, %c0_0, %c0_1] : memref<1x16x16xf32, #tpu.memory_space<vmem>>, vector<1x16x16xf32>
    %1 = vector.shape_cast %0 : vector<1x16x16xf32> to vector<16x16xf32>
    %c0_2 = arith.constant 0 : index
    %c0_3 = arith.constant 0 : index
    %2 = vector.load %arg3[%c0_2, %c0_3] : memref<16x128xf32, #tpu.memory_space<vmem>>, vector<16x128xf32>
    %cst = arith.constant dense<0.000000e+00> : vector<16x128xf32>
    %3 = tpu.matmul %1, %2, %cst {dimension_numbers = #tpu.dot_dimension_numbers<[1], [0], [0], [1], [0, 0, 1, 1], [], []>} : vector<16x16xf32>, vector<16x128xf32>, vector<16x128xf32> -> vector<16x128xf32>
    %c0_4 = arith.constant 0 : index
    %c0_5 = arith.constant 0 : index
    %4 = vector.load %arg4[%c0_4, %c0_5] : memref<16x128xf32, #tpu.memory_space<vmem>>, vector<16x128xf32>
    %cst_6 = arith.constant dense<0.000000e+00> : vector<16x128xf32>
    %5 = tpu.matmul %1, %4, %cst_6 {dimension_numbers = #tpu.dot_dimension_numbers<[1], [0], [0], [1], [0, 0, 1, 1], [], []>} : vector<16x16xf32>, vector<16x128xf32>, vector<16x128xf32> -> vector<16x128xf32>
    %6 = vector.shape_cast %5 : vector<16x128xf32> to vector<1x16x128xf32>
    %c0_7 = arith.constant 0 : index
    %c0_8 = arith.constant 0 : index
    %c0_9 = arith.constant 0 : index
    %7 = vector.load %arg2[%c0_7, %c0_8, %c0_9] : memref<1x16x16xf32, #tpu.memory_space<vmem>>, vector<1x16x16xf32>
    %cst_10 = arith.constant dense<0.000000e+00> : vector<1x16x128xf32>
    %8 = tpu.matmul %7, %6, %cst_10 {dimension_numbers = #tpu.dot_dimension_numbers<[1], [1], [2], [2], [0, 0, 0, 2, 1, 2], [0], [0]>} : vector<1x16x16xf32>, vector<1x16x128xf32>, vector<1x16x128xf32> -> vector<1x16x128xf32>
    %9 = vector.shape_cast %8 : vector<1x16x128xf32> to vector<16x128xf32>
    %10 = arith.addf %3, %9 : vector<16x128xf32>
    %cst_11 = arith.constant 0.000000e+00 : f32
    %11 = vector.broadcast %cst_11 : f32 to vector<16x128xf32>
    %12 = arith.maximumf %10, %11 : vector<16x128xf32>
    %c0_12 = arith.constant 0 : index
    %c0_13 = arith.constant 0 : index
    %13 = vector.load %arg5[%c0_12, %c0_13] : memref<128x32xf32, #tpu.memory_space<vmem>>, vector<128x32xf32>
    %cst_14 = arith.constant dense<0.000000e+00> : vector<16x32xf32>
    %14 = tpu.matmul %12, %13, %cst_14 {dimension_numbers = #tpu.dot_dimension_numbers<[1], [0], [0], [1], [0, 0, 1, 1], [], []>} : vector<16x128xf32>, vector<128x32xf32>, vector<16x32xf32> -> vector<16x32xf32>
    %c0_15 = arith.constant 0 : index
    %c0_16 = arith.constant 0 : index
    %15 = vector.load %arg6[%c0_15, %c0_16] : memref<16x32xf32, #tpu.memory_space<vmem>>, vector<16x32xf32>
    tpu.vector_store %arg6[%c0_15, %c0_16], %14 {strides = array<i32>} : memref<16x32xf32, #tpu.memory_space<vmem>>, vector<16x32xf32>,
    return
  }
  func.func @transform_0(%arg0: i32) -> (i32, i32, i32) {
    %c0_i32 = arith.constant 0 : i32
    %c0_i32_0 = arith.constant 0 : i32
    %c0_i32_1 = arith.constant 0 : i32
    return %arg0, %c0_i32, %c0_i32_0 : i32, i32, i32
  }
  func.func @transform_1(%arg0: i32) -> (i32, i32, i32) {
    %c0_i32 = arith.constant 0 : i32
    %c0_i32_0 = arith.constant 0 : i32
    %c0_i32_1 = arith.constant 0 : i32
    return %arg0, %c0_i32, %c0_i32_0 : i32, i32, i32
  }
  func.func @transform_2(%arg0: i32) -> (i32, i32) {
    %c0_i32 = arith.constant 0 : i32
    %c0_i32_0 = arith.constant 0 : i32
    %c0_i32_1 = arith.constant 0 : i32
    return %c0_i32, %c0_i32_0 : i32, i32
  }
  func.func @transform_3(%arg0: i32) -> (i32, i32) {
    %c0_i32 = arith.constant 0 : i32
    %c0_i32_0 = arith.constant 0 : i32
    %c0_i32_1 = arith.constant 0 : i32
    return %c0_i32, %c0_i32_0 : i32, i32
  }
  func.func @transform_4(%arg0: i32) -> (i32, i32) {
    %c0_i32 = arith.constant 0 : i32
    %c0_i32_0 = arith.constant 0 : i32
    %c0_i32_1 = arith.constant 0 : i32
    return %c0_i32, %c0_i32_0 : i32, i32
  }
  func.func @transform_5(%arg0: i32) -> (i32, i32) {
    %c0_i32 = arith.constant 0 : i32
    %c0_i32_0 = arith.constant 0 : i32
    return %arg0, %c0_i32 : i32, i32
  }
}

</mosaic_0001>

<llo_original>
// kernel: tpu_custom_call.1
$region0: #{tpu_custom_call.1}
  #allocation0 [shape = 'u32[]', space=smem, size = 0x4, offset = 0x4, fixed_abs, tag = 'smem constant byte address 0x4 - core index']
  #allocation1 [shape = 'u32[72,128]{1,0:T(1,128)}', space=vmem, size = 0x9000, scoped, tag = 'internal scratch']
  %s0 = inlined_call_operand.vmem [shape: f32[2,16,16], index: 0, kind: input, shape index: {}]
  %s1 = inlined_call_operand.vmem [shape: f32[2,16,16], index: 1, kind: input, shape index: {}]
  %s2 = inlined_call_operand.vmem [shape: f32[16,128], index: 2, kind: input, shape index: {}]
  %s3 = inlined_call_operand.vmem [shape: f32[16,128], index: 3, kind: input, shape index: {}]
  %s4 = inlined_call_operand.vmem [shape: f32[128,32], index: 4, kind: input, shape index: {}]
  %s5 = inlined_call_operand.hbm [shape: f32[32,32], index: 5, kind: output, shape index: {}]
  %s6 = sld [smem:[#allocation0]]
  $region53: #{tpu_custom_call.1} parent=0
    _
  %s8 = ssub.s32 1, %s6
  %s9 = scalar_select 0, %s8, %s6
  $region1: #{tpu_custom_call.1} parent=0
    #allocation2 [shape = 'u8[16384]{0}', space=vmem, size = 0x4000, scoped, tag = 'output window, operand 0']
    #allocation3 [shape = 's32[2]{0}', space=sflag, size = 0x8, scoped, tag = 'scoped memory for tpu_custom_call.1']
    %10 = vsyncpa [#allocation3], 0
    %s11 = scalar_lea.sflag [#allocation3], 1
    %12 = vsyncpa %s11, 0
    loop: start=0, step=1, limit=4
    $region2: #{tpu_custom_call.1} parent=1 // loop_pre_header
      _
    $region3: #{tpu_custom_call.1} parent=1 // loop_header
      %s14 = sphi 0, %s18
      %p15 = scmp.ge.s32.totalorder %s14, 4
      %s24 = sphi 0, %s26
      %s27 = sphi 0, %s24
      %s28 = sphi 0, %s27
      %s44 = sphi 0, %s28
      %s50 = sphi 0, %s52
      %s53 = sphi 0, %s50
      %s54 = sphi 0, %s53
      %s70 = sphi 0, %s54
      %s74 = sphi 0, %s74
      %s76 = sphi 0, %s74
      %s77 = sphi 0, %s76
      %s91 = sphi 0, %s77
      %s95 = sphi 0, %s95
      %s97 = sphi 0, %s95
      %s98 = sphi 0, %s97
      %s112 = sphi 0, %s98
      %s116 = sphi 0, %s116
      %s118 = sphi 0, %s116
      %s119 = sphi 0, %s118
      %s133 = sphi 0, %s119
      %s139 = sphi 0, %s141
      %s142 = sphi 0, %s139
      %s143 = sphi 0, %s142
      %s159 = sphi 0, %s143
    $region4: #{tpu_custom_call.1} parent=1 // loop_header_branch
      %17 = sbr.rel (%p15) target = $region8
    $region5: #{tpu_custom_call.1} parent=1 // loop_body
      %s19 = ssub.s32 %s14, 1
      %s20 = ssub.s32 %s14, 2
      %s21 = sadd.s32 %s14, 1
      %s22 = ssub.s32 %s14, %s21
      %p23 = scmp.eq.s32.totalorder %s22, 0
      %s25 = sadd.s32 %s24, 1
      %s26 = scalar_select %p23, %s24, %s25
      %p29 = pneg %p23
      %p30 = scmp.eq.s32.totalorder %s14, 1
      %p31 = por %p29, %p30
      %p32 = scmp.ne.s32.totalorder %s24, %s27
      %p33 = scmp.eq.s32.totalorder %s14, 0
      %p34 = por %p32, %p33
      %p35 = scmp.ne.s32.totalorder %s24, %s27
      %p36 = scmp.eq.s32.totalorder %s19, 1
      %p37 = por %p35, %p36
      %p38 = scmp.ne.s32.totalorder %s27, %s28
      %p39 = scmp.eq.s32.totalorder %s19, 0
      %p40 = por %p38, %p39
      %p41 = scmp.ne.s32.totalorder %s27, %s28
      %p42 = scmp.eq.s32.totalorder %s20, 1
      %p43 = por %p41, %p42
      %p45 = scmp.ne.s32.totalorder %s28, %s44
      %p46 = scmp.eq.s32.totalorder %s20, 0
      %p47 = por %p45, %p46
      %s48 = ssub.s32 %s14, %s21
      %p49 = scmp.eq.s32.totalorder %s48, 0
      %s51 = sadd.s32 %s50, 1
      %s52 = scalar_select %p49, %s50, %s51
      %p55 = pneg %p49
      %p56 = scmp.eq.s32.totalorder %s14, 1
      %p57 = por %p55, %p56
      %p58 = scmp.ne.s32.totalorder %s50, %s53
      %p59 = scmp.eq.s32.totalorder %s14, 0
      %p60 = por %p58, %p59
      %p61 = scmp.ne.s32.totalorder %s50, %s53
      %p62 = scmp.eq.s32.totalorder %s19, 1
      %p63 = por %p61, %p62
      %p64 = scmp.ne.s32.totalorder %s53, %s54
      %p65 = scmp.eq.s32.totalorder %s19, 0
      %p66 = por %p64, %p65
      %p67 = scmp.ne.s32.totalorder %s53, %s54
      %p68 = scmp.eq.s32.totalorder %s20, 1
      %p69 = por %p67, %p68
      %p71 = scmp.ne.s32.totalorder %s54, %s70
      %p72 = scmp.eq.s32.totalorder %s20, 0
      %p73 = por %p71, %p72
      %s75 = sadd.s32 %s74, 1
      %p78 = scmp.eq.s32.totalorder %s14, 1
      %p79 = scmp.ne.s32.totalorder %s74, %s76
      %p80 = scmp.eq.s32.totalorder %s14, 0
      %p81 = por %p79, %p80
      %p82 = scmp.ne.s32.totalorder %s74, %s76
      %p83 = scmp.eq.s32.totalorder %s19, 1
      %p84 = por %p82, %p83
      %p85 = scmp.ne.s32.totalorder %s76, %s77
      %p86 = scmp.eq.s32.totalorder %s19, 0
      %p87 = por %p85, %p86
      %p88 = scmp.ne.s32.totalorder %s76, %s77
      %p89 = scmp.eq.s32.totalorder %s20, 1
      %p90 = por %p88, %p89
      %p92 = scmp.ne.s32.totalorder %s77, %s91
      %p93 = scmp.eq.s32.totalorder %s20, 0
      %p94 = por %p92, %p93
      %s96 = sadd.s32 %s95, 1
      %p99 = scmp.eq.s32.totalorder %s14, 1
      %p100 = scmp.ne.s32.totalorder %s95, %s97
      %p101 = scmp.eq.s32.totalorder %s14, 0
      %p102 = por %p100, %p101
      %p103 = scmp.ne.s32.totalorder %s95, %s97
      %p104 = scmp.eq.s32.totalorder %s19, 1
      %p105 = por %p103, %p104
      %p106 = scmp.ne.s32.totalorder %s97, %s98
      %p107 = scmp.eq.s32.totalorder %s19, 0
      %p108 = por %p106, %p107
      %p109 = scmp.ne.s32.totalorder %s97, %s98
      %p110 = scmp.eq.s32.totalorder %s20, 1
      %p111 = por %p109, %p110
      %p113 = scmp.ne.s32.totalorder %s98, %s112
      %p114 = scmp.eq.s32.totalorder %s20, 0
      %p115 = por %p113, %p114
      %s117 = sadd.s32 %s116, 1
      %p120 = scmp.eq.s32.totalorder %s14, 1
      %p121 = scmp.ne.s32.totalorder %s116, %s118
      %p122 = scmp.eq.s32.totalorder %s14, 0
      %p123 = por %p121, %p122
      %p124 = scmp.ne.s32.totalorder %s116, %s118
      %p125 = scmp.eq.s32.totalorder %s19, 1
      %p126 = por %p124, %p125
      %p127 = scmp.ne.s32.totalorder %s118, %s119
      %p128 = scmp.eq.s32.totalorder %s19, 0
      %p129 = por %p127, %p128
      %p130 = scmp.ne.s32.totalorder %s118, %s119
      %p131 = scmp.eq.s32.totalorder %s20, 1
      %p132 = por %p130, %p131
      %p134 = scmp.ne.s32.totalorder %s119, %s133
      %p135 = scmp.eq.s32.totalorder %s20, 0
      %p136 = por %p134, %p135
      %s137 = ssub.s32 %s14, %s21
      %p138 = scmp.eq.s32.totalorder %s137, 0
      %s140 = sadd.s32 %s139, 1
      %s141 = scalar_select %p138, %s139, %s140
      %p144 = pneg %p138
      %p145 = scmp.eq.s32.totalorder %s14, 1
      %p146 = por %p144, %p145
      %p147 = scmp.ne.s32.totalorder %s139, %s142
      %p148 = scmp.eq.s32.totalorder %s14, 0
      %p149 = por %p147, %p148
      %p150 = scmp.ne.s32.totalorder %s139, %s142
      %p151 = scmp.eq.s32.totalorder %s19, 1
      %p152 = por %p150, %p151
      %p153 = scmp.ne.s32.totalorder %s142, %s143
      %p154 = scmp.eq.s32.totalorder %s19, 0
      %p155 = por %p153, %p154
      %p156 = scmp.ne.s32.totalorder %s142, %s143
      %p157 = scmp.eq.s32.totalorder %s20, 1
      %p158 = por %p156, %p157
      %p160 = scmp.ne.s32.totalorder %s143, %s159
      %p161 = scmp.eq.s32.totalorder %s20, 0
      %p162 = por %p160, %p161
      %p163 = scmp.le.s32.totalorder 1, %s14
      %p164 = scmp.lt.s32.totalorder %s14, 3
      %p165 = pnand %p163, %p164
      %p166 = pneg %p165
      // Predicated region
      $region9: #{tpu_custom_call.1} parent=5 // pred_check
        _
      $region10: #{tpu_custom_call.1} parent=5 // pred_check_branch
        %168 = sbr.rel (%p165) target = $region12
      $region11: #{tpu_custom_call.1} parent=5 // pred_region
        %s169 = ssub.s32 %s14, 1
        // Predicated region
        $region13: #{tpu_custom_call.1} parent=11 // pred_check
          %p170 = pneg %p87
        $region14: #{tpu_custom_call.1} parent=11 // pred_check_branch
          %172 = sbr.rel (%p170) target = $region16
        $region15: #{tpu_custom_call.1} parent=11 // pred_region
          _
        $region16: #{tpu_custom_call.1} parent=11 // pred_fallthru
          _
        // Predicated region
        $region17: #{tpu_custom_call.1} parent=11 // pred_check
          %p173 = pneg %p108
        $region18: #{tpu_custom_call.1} parent=11 // pred_check_branch
          %175 = sbr.rel (%p173) target = $region20
        $region19: #{tpu_custom_call.1} parent=11 // pred_region
          _
        $region20: #{tpu_custom_call.1} parent=11 // pred_fallthru
          _
        // Predicated region
        $region21: #{tpu_custom_call.1} parent=11 // pred_check
          %p176 = pneg %p129
        $region22: #{tpu_custom_call.1} parent=11 // pred_check_branch
          %178 = sbr.rel (%p176) target = $region24
        $region23: #{tpu_custom_call.1} parent=11 // pred_region
          _
        $region24: #{tpu_custom_call.1} parent=11 // pred_fallthru
          _
      $region12: #{tpu_custom_call.1} parent=5 // pred_fallthru
        _
      %p179 = scmp.lt.s32.totalorder %s14, 2
      // Predicated region
      $region25: #{tpu_custom_call.1} parent=5 // pred_check
        %p180 = pneg %p179
      $region26: #{tpu_custom_call.1} parent=5 // pred_check_branch
        %182 = sbr.rel (%p180) target = $region28
      $region27: #{tpu_custom_call.1} parent=5 // pred_region
        // Predicated region
        $region29: #{tpu_custom_call.1} parent=27 // pred_check
          %p183 = pneg %p34
        $region30: #{tpu_custom_call.1} parent=27 // pred_check_branch
          %185 = sbr.rel (%p183) target = $region32
        $region31: #{tpu_custom_call.1} parent=27 // pred_region
          %p186 = scmp.lt.s32.totalorder %s14, 1
          %s187 = scalar_select %p186, %s14, 1
          %s188 = smul.addr %s187, 2
          %s189 = smul.addr %s188, 8
          %s190 = scalar_lea.vmem %s0, %s189
        $region32: #{tpu_custom_call.1} parent=27 // pred_fallthru
          _
        // Predicated region
        $region33: #{tpu_custom_call.1} parent=27 // pred_check
          %p191 = pneg %p60
        $region34: #{tpu_custom_call.1} parent=27 // pred_check_branch
          %193 = sbr.rel (%p191) target = $region36
        $region35: #{tpu_custom_call.1} parent=27 // pred_region
          %p194 = scmp.lt.s32.totalorder %s14, 1
          %s195 = scalar_select %p194, %s14, 1
          %s196 = smul.addr %s195, 2
          %s197 = smul.addr %s196, 8
          %s198 = scalar_lea.vmem %s1, %s197
        $region36: #{tpu_custom_call.1} parent=27 // pred_fallthru
          _
      $region28: #{tpu_custom_call.1} parent=5 // pred_fallthru
        _
      %p199 = scmp.le.s32.totalorder 1, %s14
      %p200 = scmp.lt.s32.totalorder %s14, 3
      %p201 = pnand %p199, %p200
      %p202 = pneg %p201
      // Predicated region
      $region37: #{tpu_custom_call.1} parent=5 // pred_check
        _
      $region38: #{tpu_custom_call.1} parent=5 // pred_check_branch
        %204 = sbr.rel (%p201) target = $region40
      $region39: #{tpu_custom_call.1} parent=5 // pred_region
        %s205 = ssub.s32 %s14, 1
        %p206 = scmp.lt.s32.totalorder %s19, 1
        %s207 = scalar_select %p206, %s19, 1
        %s208 = smul.addr %s207, 2
        %s209 = smul.addr %s208, 8
        %s210 = scalar_lea.vmem %s0, %s209
        %p211 = pneg %p40
        %p212 = pneg %p37
        %p213 = scmp.lt.s32.totalorder %s19, 1
        %s214 = scalar_select %p213, %s19, 1
        %s215 = smul.addr %s214, 2
        %s216 = smul.addr %s215, 8
        %s217 = scalar_lea.vmem %s1, %s216
        %p218 = pneg %p66
        %p219 = pneg %p63
        %p220 = pneg %p87
        %p221 = pneg %p84
        %p222 = pneg %p108
        %p223 = pneg %p105
        %p224 = pneg %p129
        %p225 = pneg %p126
        %p226 = pneg %p155
        %p227 = pneg %p152
        %s228 = sand.u32 %s142, 1
        %s229 = scalar_lea.sflag [#allocation3], %s228
        %s230 = sand.u32 %s142, 1
        %s231 = smul.addr %s230, 16
        %s232 = scalar_lea.vmem [#allocation2], %s231
        %p233 = scmp.lt.s32.totalorder %s19, 1
        %s234 = scalar_select %p233, %s19, 1
        %s235 = smul.addr %s234, 2
        %s236 = smul.addr %s235, 8
        %s237 = scalar_lea.vmem %s0, %s236
        %p238 = scmp.lt.s32.totalorder %s19, 1
        %s239 = scalar_select %p238, %s19, 1
        %s240 = smul.addr %s239, 2
        %s241 = smul.addr %s240, 8
        %s242 = scalar_lea.vmem %s1, %s241
        %s243 = smul.u32 2, %s19
        %v244 = vld [vmem:[%s237] sm:$0xff]
        %v245 = vld [vmem:[%s237 + $0x8] sm:$0xff]
        %v246 = vld [vmem:[%s2] sm:$0xff]
        %v247 = vld [vmem:[%s2 + $0x8] sm:$0xff]
        %v248 = vld [vmem:[%s3] sm:$0xff]
        %v249 = vld [vmem:[%s3 + $0x8] sm:$0xff]
        %vm250 = vcmask 130048
        %v252 = vsel %vm250, %v244, 0
        %v255 = vsel %vm250, %v245, 0
        %257 = vmatpush.msra.mxu0 0.0
        %258 = vmatpush.msra.mxu0 0.0
        %259 = vmatpush.msra.mxu0 0.0
        %260 = vmatpush.msra.mxu0 0.0
        %261 = vmatpush.msra.mxu0 0.0
        %262 = vmatpush.msra.mxu0 0.0
        %263 = vmatpush.msra.mxu0 0.0
        %264 = vmatpush.msra.mxu0 0.0
        %265 = vmatpush.msra.mxu0 0.0
        %266 = vmatpush.msra.mxu0 0.0
        %267 = vmatpush.msra.mxu0 0.0
        %268 = vmatpush.msra.mxu0 0.0
        %269 = vmatpush.msra.mxu0 0.0
        %270 = vmatpush.msra.mxu0 0.0
        %271 = vmatpush.msra.mxu0 %v249
        %272 = vmatpush.msra.mxu0 %v248
        %273 = vmatmul.f32.gmra.mxu0 %v252
        %v274 = vpop.f32.mrf.mxu0
        %v275 = vadd.f32 0.0, %v274
        %276 = vmatmul.f32.gmra.mxu0 %v255
        %v277 = vpop.f32.mrf.mxu0
        %v278 = vadd.f32 0.0, %v277
        %279 = vdwg.mxu0
        %v280 = vld [vmem:[%s242] sm:$0xff]
        %v281 = vld [vmem:[%s242 + $0x8] sm:$0xff]
        %282 = vxpose.xlu0.b32.start [1/16] %v280, 128
        %283 = vxpose.xlu0.b32.cont [2/16] %v281, 128
        %284 = vxpose.xlu0.b32.cont [3/16] 0.0, 128
        %285 = vxpose.xlu0.b32.cont [4/16] 0.0, 128
        %286 = vxpose.xlu0.b32.cont [5/16] 0.0, 128
        %287 = vxpose.xlu0.b32.cont [6/16] 0.0, 128
        %288 = vxpose.xlu0.b32.cont [7/16] 0.0, 128
        %289 = vxpose.xlu0.b32.cont [8/16] 0.0, 128
        %290 = vxpose.xlu0.b32.cont [9/16] 0.0, 128
        %291 = vxpose.xlu0.b32.cont [10/16] 0.0, 128
        %292 = vxpose.xlu0.b32.cont [11/16] 0.0, 128
        %293 = vxpose.xlu0.b32.cont [12/16] 0.0, 128
        %294 = vxpose.xlu0.b32.cont [13/16] 0.0, 128
        %295 = vxpose.xlu0.b32.cont [14/16] 0.0, 128
        %296 = vxpose.xlu0.b32.cont [15/16] 0.0, 128
        %297 = vxpose.xlu0.b32.end [16/16] 0.0, 128
        %v298 = vpop.trf.xlu0
        %v299 = vpop.trf.xlu0
        %v300 = vpop.trf.xlu0
        %v301 = vpop.trf.xlu0
        %v302 = vpop.trf.xlu0
        %v303 = vpop.trf.xlu0
        %v304 = vpop.trf.xlu0
        %v305 = vpop.trf.xlu0
        %v306 = vpop.trf.xlu0
        %v307 = vpop.trf.xlu0
        %v308 = vpop.trf.xlu0
        %v309 = vpop.trf.xlu0
        %v310 = vpop.trf.xlu0
        %v311 = vpop.trf.xlu0
        %v312 = vpop.trf.xlu0
        %v313 = vpop.trf.xlu0
        %v315 = vsel %vm250, %v298, 0
        %v318 = vsel %vm250, %v299, 0
        %320 = vmatpush.msra.mxu0 0.0
        %321 = vmatpush.msra.mxu0 0.0
        %322 = vmatpush.msra.mxu0 0.0
        %323 = vmatpush.msra.mxu0 0.0
        %324 = vmatpush.msra.mxu0 0.0
        %325 = vmatpush.msra.mxu0 0.0
        %326 = vmatpush.msra.mxu0 0.0
        %327 = vmatpush.msra.mxu0 0.0
        %328 = vmatpush.msra.mxu0 0.0
        %329 = vmatpush.msra.mxu0 0.0
        %330 = vmatpush.msra.mxu0 0.0
        %331 = vmatpush.msra.mxu0 0.0
        %332 = vmatpush.msra.mxu0 0.0
        %333 = vmatpush.msra.mxu0 0.0
        %334 = vmatpush.msra.mxu0 %v278
        %335 = vmatpush.msra.mxu0 %v275
        %336 = vmatmul.f32.gmra.mxu0 %v315
        %v337 = vpop.f32.mrf.mxu0
        %v338 = vadd.f32 0.0, %v337
        %339 = vmatmul.f32.gmra.mxu0 %v318
        %v340 = vpop.f32.mrf.mxu0
        %v341 = vadd.f32 0.0, %v340
        %342 = vdwg.mxu0
        %343 = vmatpush.msra.mxu0 0.0
        %344 = vmatpush.msra.mxu0 0.0
        %345 = vmatpush.msra.mxu0 0.0
        %346 = vmatpush.msra.mxu0 0.0
        %347 = vmatpush.msra.mxu0 0.0
        %348 = vmatpush.msra.mxu0 0.0
        %349 = vmatpush.msra.mxu0 0.0
        %350 = vmatpush.msra.mxu0 0.0
        %351 = vmatpush.msra.mxu0 0.0
        %352 = vmatpush.msra.mxu0 0.0
        %353 = vmatpush.msra.mxu0 0.0
        %354 = vmatpush.msra.mxu0 0.0
        %355 = vmatpush.msra.mxu0 0.0
        %356 = vmatpush.msra.mxu0 0.0
        %357 = vmatpush.msra.mxu0 %v247
        %358 = vmatpush.msra.mxu0 %v246
        %359 = vmatmul.f32.gmra.mxu0 %v252
        %v360 = vpop.f32.mrf.mxu0
        %v361 = vadd.f32 %v338, %v360
        %362 = vmatmul.f32.gmra.mxu0 %v255
        %v363 = vpop.f32.mrf.mxu0
        %v364 = vadd.f32 %v341, %v363
        %365 = vdwg.mxu0
        %v366 = vmax.f32 %v361, 0.0
        %v367 = vmax.f32 %v364, 0.0
        %v368 = vld [vmem:[%s4] sm:$0xff]
        %v369 = vld [vmem:[%s4 + $0x8] sm:$0xff]
        %v370 = vld [vmem:[%s4 + $0x10] sm:$0xff]
        %v371 = vld [vmem:[%s4 + $0x18] sm:$0xff]
        %v372 = vld [vmem:[%s4 + $0x20] sm:$0xff]
        %v373 = vld [vmem:[%s4 + $0x28] sm:$0xff]
        %v374 = vld [vmem:[%s4 + $0x30] sm:$0xff]
        %v375 = vld [vmem:[%s4 + $0x38] sm:$0xff]
        %v376 = vld [vmem:[%s4 + $0x40] sm:$0xff]
        %v377 = vld [vmem:[%s4 + $0x48] sm:$0xff]
        %v378 = vld [vmem:[%s4 + $0x50] sm:$0xff]
        %v379 = vld [vmem:[%s4 + $0x58] sm:$0xff]
        %v380 = vld [vmem:[%s4 + $0x60] sm:$0xff]
        %v381 = vld [vmem:[%s4 + $0x68] sm:$0xff]
        %v382 = vld [vmem:[%s4 + $0x70] sm:$0xff]
        %v383 = vld [vmem:[%s4 + $0x78] sm:$0xff]
        %384 = vmatpush.msra.mxu0 %v383
        %385 = vmatpush.msra.mxu0 %v382
        %386 = vmatpush.msra.mxu0 %v381
        %387 = vmatpush.msra.mxu0 %v380
        %388 = vmatpush.msra.mxu0 %v379
        %389 = vmatpush.msra.mxu0 %v378
        %390 = vmatpush.msra.mxu0 %v377
        %391 = vmatpush.msra.mxu0 %v376
        %392 = vmatpush.msra.mxu0 %v375
        %393 = vmatpush.msra.mxu0 %v374
        %394 = vmatpush.msra.mxu0 %v373
        %395 = vmatpush.msra.mxu0 %v372
        %396 = vmatpush.msra.mxu0 %v371
        %397 = vmatpush.msra.mxu0 %v370
        %398 = vmatpush.msra.mxu0 %v369
        %399 = vmatpush.msra.mxu0 %v368
        %400 = vmatmul.f32.gmra.mxu0 %v366
        %v401 = vpop.f32.mrf.mxu0
        %v402 = vadd.f32 0.0, %v401
        %403 = vmatmul.f32.gmra.mxu0 %v367
        %v404 = vpop.f32.mrf.mxu0
        %v405 = vadd.f32 0.0, %v404
        %406 = vdwg.mxu0
        %vm407 = vcmask 261120
        %408 = vst.msk [vmem:[%s232] sm:$0xff] %vm407, %v402
        %409 = vst.msk [vmem:[%s232 + $0x8] sm:$0xff] %vm407, %v405
        %s410 = sand.u32 %s142, 1
        %s411 = scalar_lea.sflag [#allocation3], %s410
        %s412 = sand.u32 %s142, 1
        %s413 = smul.addr %s412, 16
        %s414 = scalar_lea.vmem [#allocation2], %s413
        // Predicated region
        $region41: #{tpu_custom_call.1} parent=39 // pred_check
          %p415 = pneg %p152
        $region42: #{tpu_custom_call.1} parent=39 // pred_check_branch
          %417 = sbr.rel (%p415) target = $region44
        $region43: #{tpu_custom_call.1} parent=39 // pred_region
          %s418 = smul.u32 2, %s19
          %420 = vsyncadd %s411, 0
          %s421 = smul.addr %s418, 8
          %s422 = scalar_lea.hbm %s5, %s421
          %s423 = sshll.u32 %s414, 4
          %s424 = int_to_ptr.vmem [resolvable:$true] %s423
          %s425 = sshll.u32 %s422, 4
          %s426 = int_to_ptr.hbm [resolvable:$true] %s425
          %431 = dma.vmem_to_hbm [thread:$0]  %s424, 256, %s426, %s411, 128, 128, 8
        $region44: #{tpu_custom_call.1} parent=39 // pred_fallthru
          _
      $region40: #{tpu_custom_call.1} parent=5 // pred_fallthru
        _
      %p432 = scmp.le.s32.totalorder 2, %s14
      // Predicated region
      $region45: #{tpu_custom_call.1} parent=5 // pred_check
        %p433 = pneg %p432
      $region46: #{tpu_custom_call.1} parent=5 // pred_check_branch
        %435 = sbr.rel (%p433) target = $region48
      $region47: #{tpu_custom_call.1} parent=5 // pred_region
        %s436 = ssub.s32 %s14, 2
        // Predicated region
        $region49: #{tpu_custom_call.1} parent=47 // pred_check
          %p437 = pneg %p158
        $region50: #{tpu_custom_call.1} parent=47 // pred_check_branch
          %439 = sbr.rel (%p437) target = $region52
        $region51: #{tpu_custom_call.1} parent=47 // pred_region
          %s440 = sand.u32 %s143, 1
          %s441 = scalar_lea.sflag [#allocation3], %s440
          %s442 = sand.u32 %s143, 1
          %s443 = smul.addr %s442, 16
          %s444 = scalar_lea.vmem [#allocation2], %s443
          %446 = dma.done %s441, 256
        $region52: #{tpu_custom_call.1} parent=47 // pred_fallthru
          _
      $region48: #{tpu_custom_call.1} parent=5 // pred_fallthru
        _
    $region6: #{tpu_custom_call.1} parent=1 // loop_footer
      %s18 = sadd.s32 1, %s14
    $region7: #{tpu_custom_call.1} parent=1 // loop_footer_branch
      %13 = sbr.rel target = $region3
    $region8: #{tpu_custom_call.1} parent=1 // loop_exit
      _
    %447 = vsyncpa [#allocation3], 1
    %s448 = scalar_lea.sflag [#allocation3], 1
    %449 = vsyncpa %s448, 1

</llo_original>
